<compile_context>
chip_gen: v5e
topology: v5e:2x2
jax: 0.10.0
libtpu: 0.0.40
codegen_flags: <defaults>
</compile_context>

<pallas_src>
import functools
import math

import jax
import jax.numpy as jnp
from jax.experimental import pallas as pl
from jax.experimental.pallas import tpu as pltpu


def _round_up(a: int, b: int) -> int:
    return (a + b - 1) // b * b


_MASK_VALUE = -1e30  # large negative instead of -inf to avoid inf-inf NaNs


def _flash_attn_kernel(xq_ref, xk_ref, wq_ref, wk_ref, wv_ref, o_ref,
                       q_scr, m_scr, l_scr, acc_scr,
                       *, scale, seq_len, block_kv):
    ki = pl.program_id(2)
    compute_dtype = xq_ref.dtype

    # --- init / q-projection once per (batch, q-block) ------------------------
    @pl.when(ki == 0)
    def _():
        q = jnp.dot(xq_ref[0], wq_ref[...], preferred_element_type=jnp.float32)
        q_scr[...] = (q * scale).astype(q_scr.dtype)          # fold 1/sqrt(dk) into q
        m_scr[...] = jnp.full_like(m_scr, _MASK_VALUE)
        l_scr[...] = jnp.zeros_like(l_scr)
        acc_scr[...] = jnp.zeros_like(acc_scr)

    # --- project current KV tile (native dtype operands, f32 accumulation) ----
    xk = xk_ref[0]                                             # (tk, Ep)
    k = jnp.dot(xk, wk_ref[...],
                preferred_element_type=jnp.float32).astype(compute_dtype)   # (tk, Kp)
    v = jnp.dot(xk, wv_ref[...],
                preferred_element_type=jnp.float32).astype(compute_dtype)   # (tk, Vp)

    # --- scores: contract last dims of q and k (no k.T materialization) -------
    q = q_scr[...]                                             # (tq, Kp)
    s = jax.lax.dot_general(q, k, (((1,), (1,)), ((), ())),
                            preferred_element_type=jnp.float32)             # (tq, tk)

    # mask padded KV positions (only emitted when the sequence was padded)
    if seq_len % block_kv != 0:
        col = ki * block_kv + jax.lax.broadcasted_iota(jnp.int32, s.shape, 1)
        s = jnp.where(col < seq_len, s, _MASK_VALUE)

    # --- online softmax (f32 elementwise, works on v5e/v6e/v7x) ---------------
    m_prev = m_scr[...]
    m_new = jnp.maximum(m_prev, jnp.max(s, axis=-1, keepdims=True))
    alpha = jnp.exp(m_prev - m_new)
    p = jnp.exp(s - m_new)
    l_scr[...] = alpha * l_scr[...] + jnp.sum(p, axis=-1, keepdims=True)
    acc_scr[...] = alpha * acc_scr[...] + jnp.dot(
        p.astype(compute_dtype), v, preferred_element_type=jnp.float32)
    m_scr[...] = m_new

    # --- finalize on last KV block --------------------------------------------
    @pl.when(ki == pl.num_programs(2) - 1)
    def _():
        inv_l = pl.reciprocal(l_scr[...], approx=True)
        o_ref[0] = (acc_scr[...] * inv_l).astype(o_ref.dtype)


def prepare_attention_params(wq, wk, wv, lane=128):
    """One-time parameter prep: zero-pad (out,in) Linear weights to lane-dense
    multiples of 128 and transpose to (in, out) so the kernel runs x @ W."""
    dim_k, dim_e = wq.shape
    dim_v = wv.shape[0]
    ep = _round_up(dim_e, lane)
    kp = _round_up(dim_k, lane)
    vp = _round_up(dim_v, lane)

    def pad_t(w, out_p, in_p):
        o, i = w.shape
        return jnp.pad(w, ((0, out_p - o), (0, in_p - i))).T   # (in_p, out_p)

    params = (pad_t(wq, kp, ep), pad_t(wk, kp, ep), pad_t(wv, vp, ep))
    return params, (dim_e, dim_k, dim_v)


def single_attention_layer(x, params, dims, *, block=256):
    """x: (B, S, E); params from prepare_attention_params."""
    wq_p, wk_p, wv_p = params
    dim_e, dim_k, dim_v = dims
    B, S, E = x.shape
    Ep, Kp = wq_p.shape
    Vp = wv_p.shape[1]

    # Sequence tiling (same tile for q and kv blocks keeps padding simple).
    blk = block if S >= block else _round_up(S, 8)
    s_pad = _round_up(S, blk)

    x_p = x
    if s_pad != S or Ep != E:
        x_p = jnp.pad(x, ((0, 0), (0, s_pad - S), (0, Ep - E)))

    num_q = s_pad // blk
    num_kv = s_pad // blk
    grid = (B, num_q, num_kv)

    kernel = functools.partial(
        _flash_attn_kernel,
        scale=1.0 / math.sqrt(dim_k),
        seq_len=S,
        block_kv=blk,
    )

    # TODO(synk): for very large E/dim_k/dim_v the (Ep,Kp)/(Ep,Vp) weights should
    # themselves be tiled over a K-reduction grid axis; resident weights are fine
    # for typical single-head sizes.
    out_p = pl.pallas_call(
        kernel,
        out_shape=jax.ShapeDtypeStruct((B, s_pad, Vp), x.dtype),
        grid_spec=pltpu.PrefetchScalarGridSpec(
            num_scalar_prefetch=0,
            grid=grid,
            in_specs=[
                pl.BlockSpec((1, blk, Ep), lambda b, qi, ki: (b, qi, 0)),  # x (q tile)
                pl.BlockSpec((1, blk, Ep), lambda b, qi, ki: (b, ki, 0)),  # x (kv tile)
                pl.BlockSpec((Ep, Kp), lambda b, qi, ki: (0, 0)),          # Wq (resident)
                pl.BlockSpec((Ep, Kp), lambda b, qi, ki: (0, 0)),          # Wk (resident)
                pl.BlockSpec((Ep, Vp), lambda b, qi, ki: (0, 0)),          # Wv (resident)
            ],
            out_specs=pl.BlockSpec((1, blk, Vp), lambda b, qi, ki: (b, qi, 0)),
            scratch_shapes=[
                pltpu.VMEM((blk, Kp), x.dtype),      # cached, pre-scaled q tile
                pltpu.VMEM((blk, 1), jnp.float32),   # running max m
                pltpu.VMEM((blk, 1), jnp.float32),   # running denom l
                pltpu.VMEM((blk, Vp), jnp.float32),  # output accumulator
            ],
        ),
        compiler_params=pltpu.CompilerParams(
            dimension_semantics=("parallel", "parallel", "arbitrary"),
            vmem_limit_bytes=48 * 1024 * 1024,       # fits v7x's 64 MiB physical VMEM
        ),
    )(x_p, x_p, wq_p, wk_p, wv_p)

    return out_p[:, :S, :dim_v]


def _xavier_uniform(key, shape, dtype=jnp.float32):
    # shape is (out, in) like torch.nn.Linear.weight
    fan_out, fan_in = shape
    limit = math.sqrt(6.0 / (fan_in + fan_out))
    return jax.random.uniform(key, shape, dtype=dtype, minval=-limit, maxval=limit)


def _reference(x, wq, wk, wv):
    q = x @ wq.T
    k = x @ wk.T
    v = x @ wv.T
    scores = (q @ jnp.swapaxes(k, -1, -2)) / math.sqrt(wq.shape[0])
    attn = jax.nn.softmax(scores, axis=-1)
    return attn @ v


if __name__ == "__main__":
    # small shapes consistent with the module: dim_e=32, dim_k=32, dim_v=32
    B, S = 2, 8
    dim_e, dim_k, dim_v = 32, 32, 32

    key = jax.random.PRNGKey(0)
    kx, kq, kk, kv = jax.random.split(key, 4)

    x = jax.random.normal(kx, (B, S, dim_e), dtype=jnp.float32)
    wq = _xavier_uniform(kq, (dim_k, dim_e))
    wk = _xavier_uniform(kk, (dim_k, dim_e))
    wv = _xavier_uniform(kv, (dim_v, dim_e))

    params, dims = prepare_attention_params(wq, wk, wv)

    out = single_attention_layer(x, params, dims)
    out = jax.block_until_ready(out)

    ref = _reference(x, wq, wk, wv)
    assert out.shape == (B, S, dim_v)
    # tolerance loosened vs 1e-5 because of the approximate (EUP) reciprocal in softmax
    assert jnp.allclose(out, ref, atol=1e-2, rtol=1e-2), float(jnp.max(jnp.abs(out - ref)))

    print("KERNEL_OK")
</pallas_src>

<mosaic_0001>
module attributes {stable_mosaic.version = 11 : i64} {
  func.func @_flash_attn_kernel(%arg0: i32, %arg1: i32, %arg2: i32, %arg3: memref<1x8x128xf32, #tpu.memory_space<vmem>>, %arg4: memref<1x8x128xf32, #tpu.memory_space<vmem>>, %arg5: memref<128x128xf32, #tpu.memory_space<vmem>>, %arg6: memref<128x128xf32, #tpu.memory_space<vmem>>, %arg7: memref<128x128xf32, #tpu.memory_space<vmem>>, %arg8: memref<1x8x128xf32, #tpu.memory_space<vmem>>, %arg9: memref<8x128xf32, #tpu.memory_space<vmem>>, %arg10: memref<8x1xf32, #tpu.memory_space<vmem>>, %arg11: memref<8x1xf32, #tpu.memory_space<vmem>>, %arg12: memref<8x128xf32, #tpu.memory_space<vmem>>) attributes {dimension_semantics = [#tpu.dimension_semantics<parallel>, #tpu.dimension_semantics<parallel>, #tpu.dimension_semantics<arbitrary>], iteration_bounds = array<i64: 2, 1, 1>, scalar_prefetch = 0 : i64, scratch_operands = 4 : i64, tpu.core_type = #tpu.core_type<tc>, window_params = [{transform_indices = @transform_0, window_bounds = array<i64: 1, 8, 128>}, {transform_indices = @transform_1, window_bounds = array<i64: 1, 8, 128>}, {pipeline_mode = #tpu.pipeline_mode<synchronous>, transform_indices = @transform_2, window_bounds = array<i64: 128, 128>}, {pipeline_mode = #tpu.pipeline_mode<synchronous>, transform_indices = @transform_3, window_bounds = array<i64: 128, 128>}, {pipeline_mode = #tpu.pipeline_mode<synchronous>, transform_indices = @transform_4, window_bounds = array<i64: 128, 128>}, {transform_indices = @transform_5, window_bounds = array<i64: 1, 8, 128>}]} {
    %c0_i32 = arith.constant 0 : i32
    %0 = arith.cmpi eq, %arg2, %c0_i32 : i32
    %1 = arith.extui %0 : i1 to i32
    %c0_i32_0 = arith.constant 0 : i32
    %2 = arith.cmpi ne, %1, %c0_i32_0 : i32
    scf.if %2 {
      %c0_28 = arith.constant 0 : index
      %c0_29 = arith.constant 0 : index
      %c0_30 = arith.constant 0 : index
      %36 = vector.load %arg3[%c0_28, %c0_29, %c0_30] : memref<1x8x128xf32, #tpu.memory_space<vmem>>, vector<1x8x128xf32>
      %37 = vector.shape_cast %36 : vector<1x8x128xf32> to vector<8x128xf32>
      %c0_31 = arith.constant 0 : index
      %c0_32 = arith.constant 0 : index
      %38 = vector.load %arg5[%c0_31, %c0_32] : memref<128x128xf32, #tpu.memory_space<vmem>>, vector<128x128xf32>
      %cst_33 = arith.constant dense<0.000000e+00> : vector<8x128xf32>
      %39 = tpu.matmul %37, %38, %cst_33 {dimension_numbers = #tpu.dot_dimension_numbers<[1], [0], [0], [1], [0, 0, 1, 1], [], []>} : vector<8x128xf32>, vector<128x128xf32>, vector<8x128xf32> -> vector<8x128xf32>
      %cst_34 = arith.constant 0.176776692 : f32
      %40 = vector.broadcast %cst_34 : f32 to vector<8x128xf32>
      %41 = arith.mulf %39, %40 : vector<8x128xf32>
      %c0_35 = arith.constant 0 : index
      %c0_36 = arith.constant 0 : index
      %42 = vector.load %arg9[%c0_35, %c0_36] : memref<8x128xf32, #tpu.memory_space<vmem>>, vector<8x128xf32>
      tpu.vector_store %arg9[%c0_35, %c0_36], %41 {strides = array<i32>} : memref<8x128xf32, #tpu.memory_space<vmem>>, vector<8x128xf32>,
      %cst_37 = arith.constant -1.000000e+30 : f32
      %43 = vector.broadcast %cst_37 : f32 to vector<8x1xf32>
      %c0_38 = arith.constant 0 : index
      %c0_39 = arith.constant 0 : index
      %44 = vector.load %arg10[%c0_38, %c0_39] : memref<8x1xf32, #tpu.memory_space<vmem>>, vector<8x1xf32>
      tpu.vector_store %arg10[%c0_38, %c0_39], %43 {strides = array<i32>} : memref<8x1xf32, #tpu.memory_space<vmem>>, vector<8x1xf32>,
      %cst_40 = arith.constant 0.000000e+00 : f32
      %45 = vector.broadcast %cst_40 : f32 to vector<8x1xf32>
      %c0_41 = arith.constant 0 : index
      %c0_42 = arith.constant 0 : index
      %46 = vector.load %arg11[%c0_41, %c0_42] : memref<8x1xf32, #tpu.memory_space<vmem>>, vector<8x1xf32>
      tpu.vector_store %arg11[%c0_41, %c0_42], %45 {strides = array<i32>} : memref<8x1xf32, #tpu.memory_space<vmem>>, vector<8x1xf32>,
      %cst_43 = arith.constant 0.000000e+00 : f32
      %47 = vector.broadcast %cst_43 : f32 to vector<8x128xf32>
      %c0_44 = arith.constant 0 : index
      %c0_45 = arith.constant 0 : index
      %48 = vector.load %arg12[%c0_44, %c0_45] : memref<8x128xf32, #tpu.memory_space<vmem>>, vector<8x128xf32>
      tpu.vector_store %arg12[%c0_44, %c0_45], %47 {strides = array<i32>} : memref<8x128xf32, #tpu.memory_space<vmem>>, vector<8x128xf32>,
    } else {
    }
    %c0 = arith.constant 0 : index
    %c0_1 = arith.constant 0 : index
    %c0_2 = arith.constant 0 : index
    %3 = vector.load %arg4[%c0, %c0_1, %c0_2] : memref<1x8x128xf32, #tpu.memory_space<vmem>>, vector<1x8x128xf32>
    %4 = vector.shape_cast %3 : vector<1x8x128xf32> to vector<8x128xf32>
    %c0_3 = arith.constant 0 : index
    %c0_4 = arith.constant 0 : index
    %5 = vector.load %arg6[%c0_3, %c0_4] : memref<128x128xf32, #tpu.memory_space<vmem>>, vector<128x128xf32>
    %cst = arith.constant dense<0.000000e+00> : vector<8x128xf32>
    %6 = tpu.matmul %4, %5, %cst {dimension_numbers = #tpu.dot_dimension_numbers<[1], [0], [0], [1], [0, 0, 1, 1], [], []>} : vector<8x128xf32>, vector<128x128xf32>, vector<8x128xf32> -> vector<8x128xf32>
    %c0_5 = arith.constant 0 : index
    %c0_6 = arith.constant 0 : index
    %7 = vector.load %arg7[%c0_5, %c0_6] : memref<128x128xf32, #tpu.memory_space<vmem>>, vector<128x128xf32>
    %cst_7 = arith.constant dense<0.000000e+00> : vector<8x128xf32>
    %8 = tpu.matmul %4, %7, %cst_7 {dimension_numbers = #tpu.dot_dimension_numbers<[1], [0], [0], [1], [0, 0, 1, 1], [], []>} : vector<8x128xf32>, vector<128x128xf32>, vector<8x128xf32> -> vector<8x128xf32>
    %c0_8 = arith.constant 0 : index
    %c0_9 = arith.constant 0 : index
    %9 = vector.load %arg9[%c0_8, %c0_9] : memref<8x128xf32, #tpu.memory_space<vmem>>, vector<8x128xf32>
    %cst_10 = arith.constant dense<0.000000e+00> : vector<8x8xf32>
    %10 = tpu.matmul %9, %6, %cst_10 {dimension_numbers = #tpu.dot_dimension_numbers<[1], [1], [0], [0], [0, 0, 1, 0], [], []>} : vector<8x128xf32>, vector<8x128xf32>, vector<8x8xf32> -> vector<8x8xf32>
    %c0_11 = arith.constant 0 : index
    %c0_12 = arith.constant 0 : index
    %11 = vector.load %arg10[%c0_11, %c0_12] : memref<8x1xf32, #tpu.memory_space<vmem>>, vector<8x1xf32>
    %cst_13 = arith.constant dense<0xFF800000> : vector<8xf32>
    %12 = vector.multi_reduction <maximumf>, %10, %cst_13 [1] : vector<8x8xf32> to vector<8xf32>
    %13 = vector.shape_cast %12 : vector<8xf32> to vector<8x1xf32>
    %14 = arith.maximumf %11, %13 : vector<8x1xf32>
    %15 = arith.subf %11, %14 : vector<8x1xf32>
    %16 = math.exp %15 : vector<8x1xf32>
    %17 = vector.broadcast %14 : vector<8x1xf32> to vector<8x8xf32>
    %18 = arith.subf %10, %17 : vector<8x8xf32>
    %19 = math.exp %18 : vector<8x8xf32>
    %c0_14 = arith.constant 0 : index
    %c0_15 = arith.constant 0 : index
    %20 = vector.load %arg11[%c0_14, %c0_15] : memref<8x1xf32, #tpu.memory_space<vmem>>, vector<8x1xf32>
    %21 = arith.mulf %16, %20 : vector<8x1xf32>
    %cst_16 = arith.constant dense<0.000000e+00> : vector<8xf32>
    %22 = vector.multi_reduction <add>, %19, %cst_16 [1] : vector<8x8xf32> to vector<8xf32>
    %23 = vector.shape_cast %22 : vector<8xf32> to vector<8x1xf32>
    %24 = arith.addf %21, %23 : vector<8x1xf32>
    %c0_17 = arith.constant 0 : index
    %c0_18 = arith.constant 0 : index
    %25 = vector.load %arg11[%c0_17, %c0_18] : memref<8x1xf32, #tpu.memory_space<vmem>>, vector<8x1xf32>
    tpu.vector_store %arg11[%c0_17, %c0_18], %24 {strides = array<i32>} : memref<8x1xf32, #tpu.memory_space<vmem>>, vector<8x1xf32>,
    %c0_19 = arith.constant 0 : index
    %c0_20 = arith.constant 0 : index
    %26 = vector.load %arg12[%c0_19, %c0_20] : memref<8x128xf32, #tpu.memory_space<vmem>>, vector<8x128xf32>
    %27 = vector.broadcast %16 : vector<8x1xf32> to vector<8x128xf32>
    %28 = arith.mulf %27, %26 : vector<8x128xf32>
    %cst_21 = arith.constant dense<0.000000e+00> : vector<8x128xf32>
    %29 = tpu.matmul %19, %8, %cst_21 {dimension_numbers = #tpu.dot_dimension_numbers<[1], [0], [0], [1], [0, 0, 1, 1], [], []>} : vector<8x8xf32>, vector<8x128xf32>, vector<8x128xf32> -> vector<8x128xf32>
    %30 = arith.addf %28, %29 : vector<8x128xf32>
    %c0_22 = arith.constant 0 : index
    %c0_23 = arith.constant 0 : index
    %31 = vector.load %arg12[%c0_22, %c0_23] : memref<8x128xf32, #tpu.memory_space<vmem>>, vector<8x128xf32>
    tpu.vector_store %arg12[%c0_22, %c0_23], %30 {strides = array<i32>} : memref<8x128xf32, #tpu.memory_space<vmem>>, vector<8x128xf32>,
    %c0_24 = arith.constant 0 : index
    %c0_25 = arith.constant 0 : index
    %32 = vector.load %arg10[%c0_24, %c0_25] : memref<8x1xf32, #tpu.memory_space<vmem>>, vector<8x1xf32>
    tpu.vector_store %arg10[%c0_24, %c0_25], %14 {strides = array<i32>} : memref<8x1xf32, #tpu.memory_space<vmem>>, vector<8x1xf32>,
    %c0_i32_26 = arith.constant 0 : i32
    %33 = arith.cmpi eq, %arg2, %c0_i32_26 : i32
    %34 = arith.extui %33 : i1 to i32
    %c0_i32_27 = arith.constant 0 : i32
    %35 = arith.cmpi ne, %34, %c0_i32_27 : i32
    scf.if %35 {
      %c0_28 = arith.constant 0 : index
      %c0_29 = arith.constant 0 : index
      %36 = vector.load %arg11[%c0_28, %c0_29] : memref<8x1xf32, #tpu.memory_space<vmem>>, vector<8x1xf32>
      %37 = tpu.reciprocal %36 {approx = true} : vector<8x1xf32> -> vector<8x1xf32>
      %c0_30 = arith.constant 0 : index
      %c0_31 = arith.constant 0 : index
      %38 = vector.load %arg12[%c0_30, %c0_31] : memref<8x128xf32, #tpu.memory_space<vmem>>, vector<8x128xf32>
      %39 = vector.broadcast %37 : vector<8x1xf32> to vector<8x128xf32>
      %40 = arith.mulf %38, %39 : vector<8x128xf32>
      %c0_32 = arith.constant 0 : index
      %c0_33 = arith.constant 0 : index
      %c0_34 = arith.constant 0 : index
      %41 = vector.load %arg8[%c0_32, %c0_33, %c0_34] : memref<1x8x128xf32, #tpu.memory_space<vmem>>, vector<1x8x128xf32>
      %42 = vector.shape_cast %41 : vector<1x8x128xf32> to vector<8x128xf32>
      %43 = vector.shape_cast %40 : vector<8x128xf32> to vector<1x8x128xf32>
      tpu.vector_store %arg8[%c0_32, %c0_33, %c0_34], %43 {strides = array<i32>} : memref<1x8x128xf32, #tpu.memory_space<vmem>>, vector<1x8x128xf32>,
    } else {
    }
    return
  }
  func.func @transform_0(%arg0: i32, %arg1: i32, %arg2: i32) -> (i32, i32, i32) {
    %c0_i32 = arith.constant 0 : i32
    %c0_i32_0 = arith.constant 0 : i32
    return %arg0, %arg1, %c0_i32 : i32, i32, i32
  }
  func.func @transform_1(%arg0: i32, %arg1: i32, %arg2: i32) -> (i32, i32, i32) {
    %c0_i32 = arith.constant 0 : i32
    %c0_i32_0 = arith.constant 0 : i32
    return %arg0, %arg2, %c0_i32 : i32, i32, i32
  }
  func.func @transform_2(%arg0: i32, %arg1: i32, %arg2: i32) -> (i32, i32) {
    %c0_i32 = arith.constant 0 : i32
    %c0_i32_0 = arith.constant 0 : i32
    %c0_i32_1 = arith.constant 0 : i32
    return %c0_i32, %c0_i32_0 : i32, i32
  }
  func.func @transform_3(%arg0: i32, %arg1: i32, %arg2: i32) -> (i32, i32) {
    %c0_i32 = arith.constant 0 : i32
    %c0_i32_0 = arith.constant 0 : i32
    %c0_i32_1 = arith.constant 0 : i32
    return %c0_i32, %c0_i32_0 : i32, i32
  }
  func.func @transform_4(%arg0: i32, %arg1: i32, %arg2: i32) -> (i32, i32) {
    %c0_i32 = arith.constant 0 : i32
    %c0_i32_0 = arith.constant 0 : i32
    %c0_i32_1 = arith.constant 0 : i32
    return %c0_i32, %c0_i32_0 : i32, i32
  }
  func.func @transform_5(%arg0: i32, %arg1: i32, %arg2: i32) -> (i32, i32, i32) {
    %c0_i32 = arith.constant 0 : i32
    %c0_i32_0 = arith.constant 0 : i32
    return %arg0, %arg1, %c0_i32 : i32, i32, i32
  }
}

</mosaic_0001>

<llo_original>
// kernel: tpu_custom_call.1
$region0: #{tpu_custom_call.1}
  #allocation0 [shape = 'u32[]', space=smem, size = 0x4, offset = 0x4, fixed_abs, tag = 'smem constant byte address 0x4 - core index']
  #allocation1 [shape = 'u32[72,128]{1,0:T(1,128)}', space=vmem, size = 0x9000, scoped, tag = 'internal scratch']
  #allocation2 [shape = 'f32[8,128]{1,0:T(8,128)}', space=vmem, size = 0x1000, scoped, tag = 'scratch operand']
  #allocation3 [shape = 'f32[8,1]{1,0:T(8,128)}', space=vmem, size = 0x1000, scoped, tag = 'scratch operand']
  #allocation4 [shape = 'f32[8,1]{1,0:T(8,128)}', space=vmem, size = 0x1000, scoped, tag = 'scratch operand']
  #allocation5 [shape = 'f32[8,128]{1,0:T(8,128)}', space=vmem, size = 0x1000, scoped, tag = 'scratch operand']
  %s0 = inlined_call_operand.hbm [shape: f32[2,8,128], index: 0, kind: input, shape index: {}]
  %s1 = inlined_call_operand.hbm [shape: f32[2,8,128], index: 1, kind: input, shape index: {}]
  %s2 = inlined_call_operand.hbm [shape: f32[128,128], index: 2, kind: input, shape index: {}]
  %s3 = inlined_call_operand.hbm [shape: f32[128,128], index: 3, kind: input, shape index: {}]
  %s4 = inlined_call_operand.hbm [shape: f32[128,128], index: 4, kind: input, shape index: {}]
  %s5 = inlined_call_operand.hbm [shape: f32[2,8,128], index: 5, kind: output, shape index: {}]
  %s6 = sld [smem:[#allocation0]]
  $region81: #{tpu_custom_call.1} parent=0
    _
  %s8 = ssub.s32 1, %s6
  %s9 = scalar_select 0, %s8, %s6
  $region1: #{tpu_custom_call.1} parent=0
    #allocation6 [shape = 'u8[8192]{0}', space=vmem, size = 0x2000, scoped, tag = 'input window, operand 0']
    #allocation7 [shape = 's32[2]{0}', space=sflag, size = 0x8, scoped, tag = 'scoped memory for tpu_custom_call.1']
    #allocation8 [shape = 's32[2]{0}', space=sflag, size = 0x8, scoped, tag = 'scoped memory for tpu_custom_call.1']
    #allocation9 [shape = 'u8[8192]{0}', space=vmem, size = 0x2000, scoped, tag = 'input window, operand 1']
    #allocation10 [shape = 's32[2]{0}', space=sflag, size = 0x8, scoped, tag = 'scoped memory for tpu_custom_call.1']
    #allocation11 [shape = 'u8[65536]{0}', space=vmem, size = 0x10000, scoped, tag = 'input window, operand 2, single buffered']
    #allocation12 [shape = 'u8[65536]{0}', space=vmem, size = 0x10000, scoped, tag = 'input window, operand 3, single buffered']
    #allocation13 [shape = 's32[1]{0}', space=sflag, size = 0x4, scoped, tag = 'scoped memory for tpu_custom_call.1']
    #allocation14 [shape = 'u8[65536]{0}', space=vmem, size = 0x10000, scoped, tag = 'input window, operand 4, single buffered']
    #allocation15 [shape = 'u8[8192]{0}', space=vmem, size = 0x2000, scoped, tag = 'output window, operand 0']
    %10 = vsyncpa [#allocation7], 0
    %s11 = scalar_lea.sflag [#allocation7], 1
    %12 = vsyncpa %s11, 0
    %13 = vsyncpa [#allocation10], 0
    %s14 = scalar_lea.sflag [#allocation10], 1
    %15 = vsyncpa %s14, 0
    %16 = vsyncpa [#allocation13], 0
    %17 = vsyncpa [#allocation8], 0
    %s18 = scalar_lea.sflag [#allocation8], 1
    %19 = vsyncpa %s18, 0
    loop: start=0, step=1, limit=4
    $region2: #{tpu_custom_call.1} parent=1 // loop_pre_header
      _
    $region3: #{tpu_custom_call.1} parent=1 // loop_header
      %s21 = sphi 0, %s25
      %p22 = scmp.ge.s32.totalorder %s21, 4
      %s28 = sphi 0, %s47
      %s29 = sphi 0, %s43
      %s30 = sphi 0, %s39
      %s31 = sphi 0, %s28
      %s32 = sphi 0, %s29
      %s33 = sphi 0, %s30
      %s34 = sphi 0, %s31
      %s35 = sphi 0, %s32
      %s36 = sphi 0, %s33
      %s52 = sphi 0, %s54
      %s55 = sphi 0, %s52
      %s56 = sphi 0, %s55
      %s72 = sphi 0, %s56
      %s80 = sphi 0, %s82
      %s83 = sphi 0, %s80
      %s84 = sphi 0, %s83
      %s100 = sphi 0, %s84
      %s104 = sphi 0, %s104
      %s106 = sphi 0, %s104
      %s107 = sphi 0, %s106
      %s121 = sphi 0, %s107
      %s125 = sphi 0, %s125
      %s127 = sphi 0, %s125
      %s128 = sphi 0, %s127
      %s142 = sphi 0, %s128
      %s146 = sphi 0, %s146
      %s148 = sphi 0, %s146
      %s149 = sphi 0, %s148
      %s163 = sphi 0, %s149
      %s171 = sphi 0, %s173
      %s174 = sphi 0, %s171
      %s175 = sphi 0, %s174
      %s191 = sphi 0, %s175
    $region4: #{tpu_custom_call.1} parent=1 // loop_header_branch
      %24 = sbr.rel (%p22) target = $region8
    $region5: #{tpu_custom_call.1} parent=1 // loop_body
      %s26 = ssub.s32 %s21, 1
      %s27 = ssub.s32 %s21, 2
      %s37 = sadd.s32 1, %s30
      %p38 = scmp.ge.s32.totalorder %s37, 1
      %s39 = scalar_select %p38, 0, %s37
      %s40 = sadd.s32 1, %s29
      %s41 = scalar_select %p38, %s40, %s29
      %p42 = scmp.ge.s32.totalorder %s41, 1
      %s43 = scalar_select %p42, 0, %s41
      %s44 = sadd.s32 1, %s28
      %s45 = scalar_select %p42, %s44, %s28
      %p46 = scmp.ge.s32.totalorder %s45, 2
      %s47 = scalar_select %p46, 0, %s45
      %s48 = ssub.s32 %s28, %s47
      %s49 = ssub.s32 %s29, %s43
      %s50 = sor.u32 %s48, %s49
      %p51 = scmp.eq.s32.totalorder %s50, 0
      %s53 = sadd.s32 %s52, 1
      %s54 = scalar_select %p51, %s52, %s53
      %p57 = pneg %p51
      %p58 = scmp.eq.s32.totalorder %s21, 1
      %p59 = por %p57, %p58
      %p60 = scmp.ne.s32.totalorder %s52, %s55
      %p61 = scmp.eq.s32.totalorder %s21, 0
      %p62 = por %p60, %p61
      %p63 = scmp.ne.s32.totalorder %s52, %s55
      %p64 = scmp.eq.s32.totalorder %s26, 1
      %p65 = por %p63, %p64
      %p66 = scmp.ne.s32.totalorder %s55, %s56
      %p67 = scmp.eq.s32.totalorder %s26, 0
      %p68 = por %p66, %p67
      %p69 = scmp.ne.s32.totalorder %s55, %s56
      %p70 = scmp.eq.s32.totalorder %s27, 1
      %p71 = por %p69, %p70
      %p73 = scmp.ne.s32.totalorder %s56, %s72
      %p74 = scmp.eq.s32.totalorder %s27, 0
      %p75 = por %p73, %p74
      %s76 = ssub.s32 %s28, %s47
      %s77 = ssub.s32 %s30, %s39
      %s78 = sor.u32 %s76, %s77
      %p79 = scmp.eq.s32.totalorder %s78, 0
      %s81 = sadd.s32 %s80, 1
      %s82 = scalar_select %p79, %s80, %s81
      %p85 = pneg %p79
      %p86 = scmp.eq.s32.totalorder %s21, 1
      %p87 = por %p85, %p86
      %p88 = scmp.ne.s32.totalorder %s80, %s83
      %p89 = scmp.eq.s32.totalorder %s21, 0
      %p90 = por %p88, %p89
      %p91 = scmp.ne.s32.totalorder %s80, %s83
      %p92 = scmp.eq.s32.totalorder %s26, 1
      %p93 = por %p91, %p92
      %p94 = scmp.ne.s32.totalorder %s83, %s84
      %p95 = scmp.eq.s32.totalorder %s26, 0
      %p96 = por %p94, %p95
      %p97 = scmp.ne.s32.totalorder %s83, %s84
      %p98 = scmp.eq.s32.totalorder %s27, 1
      %p99 = por %p97, %p98
      %p101 = scmp.ne.s32.totalorder %s84, %s100
      %p102 = scmp.eq.s32.totalorder %s27, 0
      %p103 = por %p101, %p102
      %s105 = sadd.s32 %s104, 1
      %p108 = scmp.eq.s32.totalorder %s21, 1
      %p109 = scmp.ne.s32.totalorder %s104, %s106
      %p110 = scmp.eq.s32.totalorder %s21, 0
      %p111 = por %p109, %p110
      %p112 = scmp.ne.s32.totalorder %s104, %s106
      %p113 = scmp.eq.s32.totalorder %s26, 1
      %p114 = por %p112, %p113
      %p115 = scmp.ne.s32.totalorder %s106, %s107
      %p116 = scmp.eq.s32.totalorder %s26, 0
      %p117 = por %p115, %p116
      %p118 = scmp.ne.s32.totalorder %s106, %s107
      %p119 = scmp.eq.s32.totalorder %s27, 1
      %p120 = por %p118, %p119
      %p122 = scmp.ne.s32.totalorder %s107, %s121
      %p123 = scmp.eq.s32.totalorder %s27, 0
      %p124 = por %p122, %p123
      %s126 = sadd.s32 %s125, 1
      %p129 = scmp.eq.s32.totalorder %s21, 1
      %p130 = scmp.ne.s32.totalorder %s125, %s127
      %p131 = scmp.eq.s32.totalorder %s21, 0
      %p132 = por %p130, %p131
      %p133 = scmp.ne.s32.totalorder %s125, %s127
      %p134 = scmp.eq.s32.totalorder %s26, 1
      %p135 = por %p133, %p134
      %p136 = scmp.ne.s32.totalorder %s127, %s128
      %p137 = scmp.eq.s32.totalorder %s26, 0
      %p138 = por %p136, %p137
      %p139 = scmp.ne.s32.totalorder %s127, %s128
      %p140 = scmp.eq.s32.totalorder %s27, 1
      %p141 = por %p139, %p140
      %p143 = scmp.ne.s32.totalorder %s128, %s142
      %p144 = scmp.eq.s32.totalorder %s27, 0
      %p145 = por %p143, %p144
      %s147 = sadd.s32 %s146, 1
      %p150 = scmp.eq.s32.totalorder %s21, 1
      %p151 = scmp.ne.s32.totalorder %s146, %s148
      %p152 = scmp.eq.s32.totalorder %s21, 0
      %p153 = por %p151, %p152
      %p154 = scmp.ne.s32.totalorder %s146, %s148
      %p155 = scmp.eq.s32.totalorder %s26, 1
      %p156 = por %p154, %p155
      %p157 = scmp.ne.s32.totalorder %s148, %s149
      %p158 = scmp.eq.s32.totalorder %s26, 0
      %p159 = por %p157, %p158
      %p160 = scmp.ne.s32.totalorder %s148, %s149
      %p161 = scmp.eq.s32.totalorder %s27, 1
      %p162 = por %p160, %p161
      %p164 = scmp.ne.s32.totalorder %s149, %s163
      %p165 = scmp.eq.s32.totalorder %s27, 0
      %p166 = por %p164, %p165
      %s167 = ssub.s32 %s28, %s47
      %s168 = ssub.s32 %s29, %s43
      %s169 = sor.u32 %s167, %s168
      %p170 = scmp.eq.s32.totalorder %s169, 0
      %s172 = sadd.s32 %s171, 1
      %s173 = scalar_select %p170, %s171, %s172
      %p176 = pneg %p170
      %p177 = scmp.eq.s32.totalorder %s21, 1
      %p178 = por %p176, %p177
      %p179 = scmp.ne.s32.totalorder %s171, %s174
      %p180 = scmp.eq.s32.totalorder %s21, 0
      %p181 = por %p179, %p180
      %p182 = scmp.ne.s32.totalorder %s171, %s174
      %p183 = scmp.eq.s32.totalorder %s26, 1
      %p184 = por %p182, %p183
      %p185 = scmp.ne.s32.totalorder %s174, %s175
      %p186 = scmp.eq.s32.totalorder %s26, 0
      %p187 = por %p185, %p186
      %p188 = scmp.ne.s32.totalorder %s174, %s175
      %p189 = scmp.eq.s32.totalorder %s27, 1
      %p190 = por %p188, %p189
      %p192 = scmp.ne.s32.totalorder %s175, %s191
      %p193 = scmp.eq.s32.totalorder %s27, 0
      %p194 = por %p192, %p193
      %p195 = scmp.le.s32.totalorder 1, %s21
      %p196 = scmp.lt.s32.totalorder %s21, 3
      %p197 = pnand %p195, %p196
      %p198 = pneg %p197
      // Predicated region
      $region9: #{tpu_custom_call.1} parent=5 // pred_check
        _
      $region10: #{tpu_custom_call.1} parent=5 // pred_check_branch
        %200 = sbr.rel (%p197) target = $region12
      $region11: #{tpu_custom_call.1} parent=5 // pred_region
        %s201 = ssub.s32 %s21, 1
        // Predicated region
        $region13: #{tpu_custom_call.1} parent=11 // pred_check
          %p202 = pneg %p117
        $region14: #{tpu_custom_call.1} parent=11 // pred_check_branch
          %204 = sbr.rel (%p202) target = $region16
        $region15: #{tpu_custom_call.1} parent=11 // pred_region
          %206 = vsyncadd [#allocation10], 0
          %s207 = sshll.u32 %s2, 4
          %s208 = int_to_ptr.hbm [resolvable:$true] %s207
          %s209 = sshll.u32 [#allocation11], 4
          %s210 = int_to_ptr.vmem [resolvable:$true] %s209
          %215 = dma.hbm_to_vmem [thread:$0]  %s208, 2048, %s210, [#allocation10], 128, 128, 8
        $region16: #{tpu_custom_call.1} parent=11 // pred_fallthru
          _
        // Predicated region
        $region17: #{tpu_custom_call.1} parent=11 // pred_check
          %p216 = pneg %p138
        $region18: #{tpu_custom_call.1} parent=11 // pred_check_branch
          %218 = sbr.rel (%p216) target = $region20
        $region19: #{tpu_custom_call.1} parent=11 // pred_region
          %220 = vsyncadd [#allocation13], 0
          %s221 = sshll.u32 %s3, 4
          %s222 = int_to_ptr.hbm [resolvable:$true] %s221
          %s223 = sshll.u32 [#allocation12], 4
          %s224 = int_to_ptr.vmem [resolvable:$true] %s223
          %229 = dma.hbm_to_vmem [thread:$0]  %s222, 2048, %s224, [#allocation13], 128, 128, 8
        $region20: #{tpu_custom_call.1} parent=11 // pred_fallthru
          _
        // Predicated region
        $region21: #{tpu_custom_call.1} parent=11 // pred_check
          %p230 = pneg %p159
        $region22: #{tpu_custom_call.1} parent=11 // pred_check_branch
          %232 = sbr.rel (%p230) target = $region24
        $region23: #{tpu_custom_call.1} parent=11 // pred_region
          %234 = vsyncadd [#allocation13], 0
          %s235 = sshll.u32 %s4, 4
          %s236 = int_to_ptr.hbm [resolvable:$true] %s235
          %s237 = sshll.u32 [#allocation14], 4
          %s238 = int_to_ptr.vmem [resolvable:$true] %s237
          %243 = dma.hbm_to_vmem [thread:$0]  %s236, 2048, %s238, [#allocation13], 128, 128, 8
        $region24: #{tpu_custom_call.1} parent=11 // pred_fallthru
          _
      $region12: #{tpu_custom_call.1} parent=5 // pred_fallthru
        _
      %p244 = scmp.lt.s32.totalorder %s21, 2
      // Predicated region
      $region25: #{tpu_custom_call.1} parent=5 // pred_check
        %p245 = pneg %p244
      $region26: #{tpu_custom_call.1} parent=5 // pred_check_branch
        %247 = sbr.rel (%p245) target = $region28
      $region27: #{tpu_custom_call.1} parent=5 // pred_region
        // Predicated region
        $region29: #{tpu_custom_call.1} parent=27 // pred_check
          %p248 = pneg %p62
        $region30: #{tpu_custom_call.1} parent=27 // pred_check_branch
          %250 = sbr.rel (%p248) target = $region32
        $region31: #{tpu_custom_call.1} parent=27 // pred_region
          %s251 = sand.u32 %s52, 1
          %s252 = scalar_lea.sflag [#allocation7], %s251
          %s253 = sand.u32 %s52, 1
          %s254 = smul.addr %s253, 8
          %s255 = scalar_lea.vmem [#allocation6], %s254
          %257 = vsyncadd %s252, 0
          %s258 = sadd.s32 %s29, %s28
          %s259 = smul.addr %s258, 8
          %s260 = scalar_lea.hbm %s0, %s259
          %s262 = sshll.u32 %s260, 4
          %s263 = int_to_ptr.hbm [resolvable:$true] %s262
          %s264 = sshll.u32 %s255, 4
          %s265 = int_to_ptr.vmem [resolvable:$true] %s264
          %267 = dma.hbm_to_vmem [thread:$0]  %s263, 128, %s265, %s252
        $region32: #{tpu_custom_call.1} parent=27 // pred_fallthru
          _
        // Predicated region
        $region33: #{tpu_custom_call.1} parent=27 // pred_check
          %p268 = pneg %p90
        $region34: #{tpu_custom_call.1} parent=27 // pred_check_branch
          %270 = sbr.rel (%p268) target = $region36
        $region35: #{tpu_custom_call.1} parent=27 // pred_region
          %s271 = sand.u32 %s21, 1
          %s272 = scalar_lea.sflag [#allocation10], %s271
          %s273 = sand.u32 %s80, 1
          %s274 = smul.addr %s273, 8
          %s275 = scalar_lea.vmem [#allocation9], %s274
          %277 = vsyncadd %s272, 0
          %s278 = sadd.s32 %s30, %s28
          %s279 = smul.addr %s278, 8
          %s280 = scalar_lea.hbm %s1, %s279
          %s282 = sshll.u32 %s280, 4
          %s283 = int_to_ptr.hbm [resolvable:$true] %s282
          %s284 = sshll.u32 %s275, 4
          %s285 = int_to_ptr.vmem [resolvable:$true] %s284
          %287 = dma.hbm_to_vmem [thread:$0]  %s283, 128, %s285, %s272
        $region36: #{tpu_custom_call.1} parent=27 // pred_fallthru
          _
      $region28: #{tpu_custom_call.1} parent=5 // pred_fallthru
        _
      %p288 = scmp.le.s32.totalorder 1, %s21
      %p289 = scmp.lt.s32.totalorder %s21, 3
      %p290 = pnand %p288, %p289
      %p291 = pneg %p290
      // Predicated region
      $region37: #{tpu_custom_call.1} parent=5 // pred_check
        _
      $region38: #{tpu_custom_call.1} parent=5 // pred_check_branch
        %293 = sbr.rel (%p290) target = $region40
      $region39: #{tpu_custom_call.1} parent=5 // pred_region
        %s294 = ssub.s32 %s21, 1
        %s295 = sand.u32 %s55, 1
        %s296 = scalar_lea.sflag [#allocation7], %s295
        %s297 = sand.u32 %s55, 1
        %s298 = smul.addr %s297, 8
        %s299 = scalar_lea.vmem [#allocation6], %s298
        // Predicated region
        $region41: #{tpu_custom_call.1} parent=39 // pred_check
          %p300 = pneg %p68
        $region42: #{tpu_custom_call.1} parent=39 // pred_check_branch
          %302 = sbr.rel (%p300) target = $region44
        $region43: #{tpu_custom_call.1} parent=39 // pred_region
          %304 = dma.done %s296, 128
        $region44: #{tpu_custom_call.1} parent=39 // pred_fallthru
          _
        %s305 = sand.u32 %s26, 1
        %s306 = scalar_lea.sflag [#allocation10], %s305
        %s307 = sand.u32 %s83, 1
        %s308 = smul.addr %s307, 8
        %s309 = scalar_lea.vmem [#allocation9], %s308
        // Predicated region
        $region45: #{tpu_custom_call.1} parent=39 // pred_check
          %p310 = pneg %p96
        $region46: #{tpu_custom_call.1} parent=39 // pred_check_branch
          %312 = sbr.rel (%p310) target = $region48
        $region47: #{tpu_custom_call.1} parent=39 // pred_region
          %314 = dma.done %s306, 128
        $region48: #{tpu_custom_call.1} parent=39 // pred_fallthru
          _
        // Predicated region
        $region49: #{tpu_custom_call.1} parent=39 // pred_check
          %p315 = pneg %p117
        $region50: #{tpu_custom_call.1} parent=39 // pred_check_branch
          %317 = sbr.rel (%p315) target = $region52
        $region51: #{tpu_custom_call.1} parent=39 // pred_region
          %319 = dma.done [#allocation10], 2048
        $region52: #{tpu_custom_call.1} parent=39 // pred_fallthru
          _
        // Predicated region
        $region53: #{tpu_custom_call.1} parent=39 // pred_check
          %p320 = pneg %p138
        $region54: #{tpu_custom_call.1} parent=39 // pred_check_branch
          %322 = sbr.rel (%p320) target = $region56
        $region55: #{tpu_custom_call.1} parent=39 // pred_region
          %324 = dma.done [#allocation13], 2048
        $region56: #{tpu_custom_call.1} parent=39 // pred_fallthru
          _
        // Predicated region
        $region57: #{tpu_custom_call.1} parent=39 // pred_check
          %p325 = pneg %p159
        $region58: #{tpu_custom_call.1} parent=39 // pred_check_branch
          %327 = sbr.rel (%p325) target = $region60
        $region59: #{tpu_custom_call.1} parent=39 // pred_region
          %329 = dma.done [#allocation13], 2048
        $region60: #{tpu_custom_call.1} parent=39 // pred_fallthru
          _
        %s330 = sand.u32 %s55, 1
        %s331 = scalar_lea.sflag [#allocation7], %s330
        %s332 = sand.u32 %s55, 1
        %s333 = smul.addr %s332, 8
        %s334 = scalar_lea.vmem [#allocation6], %s333
        %p335 = pneg %p68
        %p336 = pneg %p65
        %s337 = sand.u32 %s26, 1
        %s338 = scalar_lea.sflag [#allocation10], %s337
        %s339 = sand.u32 %s83, 1
        %s340 = smul.addr %s339, 8
        %s341 = scalar_lea.vmem [#allocation9], %s340
        %p342 = pneg %p96
        %p343 = pneg %p93
        %p344 = pneg %p117
        %p345 = pneg %p114
        %p346 = pneg %p138
        %p347 = pneg %p135
        %p348 = pneg %p159
        %p349 = pneg %p156
        %p350 = pneg %p187
        %p351 = pneg %p184
        %s352 = sand.u32 %s174, 1
        %s353 = scalar_lea.sflag [#allocation8], %s352
        %s354 = sand.u32 %s174, 1
        %s355 = smul.addr %s354, 8
        %s356 = scalar_lea.vmem [#allocation15], %s355
        %p357 = scmp.eq.s32.totalorder %s33, 0
        // Predicated region
        $region61: #{tpu_custom_call.1} parent=39 // pred_check
          %p358 = pneg %p357
        $region62: #{tpu_custom_call.1} parent=39 // pred_check_branch
          %360 = sbr.rel (%p358) target = $region64
        $region63: #{tpu_custom_call.1} parent=39 // pred_region
          %v361 = vld [vmem:[%s299] sm:$0xff]
          %v362 = vld [vmem:[#allocation11] sm:$0xff]
          %v363 = vld [vmem:[#allocation11 + $0x8] sm:$0xff]
          %v364 = vld [vmem:[#allocation11 + $0x10] sm:$0xff]
          %v365 = vld [vmem:[#allocation11 + $0x18] sm:$0xff]
          %v366 = vld [vmem:[#allocation11 + $0x20] sm:$0xff]
          %v367 = vld [vmem:[#allocation11 + $0x28] sm:$0xff]
          %v368 = vld [vmem:[#allocation11 + $0x30] sm:$0xff]
          %v369 = vld [vmem:[#allocation11 + $0x38] sm:$0xff]
          %v370 = vld [vmem:[#allocation11 + $0x40] sm:$0xff]
          %v371 = vld [vmem:[#allocation11 + $0x48] sm:$0xff]
          %v372 = vld [vmem:[#allocation11 + $0x50] sm:$0xff]
          %v373 = vld [vmem:[#allocation11 + $0x58] sm:$0xff]
          %v374 = vld [vmem:[#allocation11 + $0x60] sm:$0xff]
          %v375 = vld [vmem:[#allocation11 + $0x68] sm:$0xff]
          %v376 = vld [vmem:[#allocation11 + $0x70] sm:$0xff]
          %v377 = vld [vmem:[#allocation11 + $0x78] sm:$0xff]
          %378 = vmatpush.msra.mxu0 %v377
          %379 = vmatpush.msra.mxu0 %v376
          %380 = vmatpush.msra.mxu0 %v375
          %381 = vmatpush.msra.mxu0 %v374
          %382 = vmatpush.msra.mxu0 %v373
          %383 = vmatpush.msra.mxu0 %v372
          %384 = vmatpush.msra.mxu0 %v371
          %385 = vmatpush.msra.mxu0 %v370
          %386 = vmatpush.msra.mxu0 %v369
          %387 = vmatpush.msra.mxu0 %v368
          %388 = vmatpush.msra.mxu0 %v367
          %389 = vmatpush.msra.mxu0 %v366
          %390 = vmatpush.msra.mxu0 %v365
          %391 = vmatpush.msra.mxu0 %v364
          %392 = vmatpush.msra.mxu0 %v363
          %393 = vmatpush.msra.mxu0 %v362
          %394 = vmatmul.f32.gmra.mxu0 %v361
          %v395 = vpop.f32.mrf.mxu0
          %v396 = vadd.f32 0.0, %v395
          %397 = vdwg.mxu0
          %v398 = vmul.f32 %v396, 0.17677669
          %399 = vst [vmem:[#allocation2] sm:$0xff] %v398
          %vm400 = vcmask 7168
          %401 = vst.msk [vmem:[#allocation3] sm:$0xff] %vm400, -1e+30
          %402 = vst.msk [vmem:[#allocation4] sm:$0xff] %vm400, 0.0
          %403 = vst [vmem:[#allocation5] sm:$0xff] 0.0
        $region64: #{tpu_custom_call.1} parent=39 // pred_fallthru
          _
        %v404 = vld [vmem:[%s309] sm:$0xff]
        %v405 = vld [vmem:[#allocation12] sm:$0xff]
        %v406 = vld [vmem:[#allocation12 + $0x8] sm:$0xff]
        %v407 = vld [vmem:[#allocation12 + $0x10] sm:$0xff]
        %v408 = vld [vmem:[#allocation12 + $0x18] sm:$0xff]
        %v409 = vld [vmem:[#allocation12 + $0x20] sm:$0xff]
        %v410 = vld [vmem:[#allocation12 + $0x28] sm:$0xff]
        %v411 = vld [vmem:[#allocation12 + $0x30] sm:$0xff]
        %v412 = vld [vmem:[#allocation12 + $0x38] sm:$0xff]
        %v413 = vld [vmem:[#allocation12 + $0x40] sm:$0xff]
        %v414 = vld [vmem:[#allocation12 + $0x48] sm:$0xff]
        %v415 = vld [vmem:[#allocation12 + $0x50] sm:$0xff]
        %v416 = vld [vmem:[#allocation12 + $0x58] sm:$0xff]
        %v417 = vld [vmem:[#allocation12 + $0x60] sm:$0xff]
        %v418 = vld [vmem:[#allocation12 + $0x68] sm:$0xff]
        %v419 = vld [vmem:[#allocation12 + $0x70] sm:$0xff]
        %v420 = vld [vmem:[#allocation12 + $0x78] sm:$0xff]
        %421 = vmatpush.msra.mxu0 %v420
        %422 = vmatpush.msra.mxu0 %v419
        %423 = vmatpush.msra.mxu0 %v418
        %424 = vmatpush.msra.mxu0 %v417
        %425 = vmatpush.msra.mxu0 %v416
        %426 = vmatpush.msra.mxu0 %v415
        %427 = vmatpush.msra.mxu0 %v414
        %428 = vmatpush.msra.mxu0 %v413
        %429 = vmatpush.msra.mxu0 %v412
        %430 = vmatpush.msra.mxu0 %v411
        %431 = vmatpush.msra.mxu0 %v410
        %432 = vmatpush.msra.mxu0 %v409
        %433 = vmatpush.msra.mxu0 %v408
        %434 = vmatpush.msra.mxu0 %v407
        %435 = vmatpush.msra.mxu0 %v406
        %436 = vmatpush.msra.mxu0 %v405
        %437 = vmatmul.f32.gmra.mxu0 %v404
        %v438 = vpop.f32.mrf.mxu0
        %v439 = vadd.f32 0.0, %v438
        %440 = vdwg.mxu0
        %v441 = vld [vmem:[#allocation14] sm:$0xff]
        %v442 = vld [vmem:[#allocation14 + $0x8] sm:$0xff]
        %v443 = vld [vmem:[#allocation14 + $0x10] sm:$0xff]
        %v444 = vld [vmem:[#allocation14 + $0x18] sm:$0xff]
        %v445 = vld [vmem:[#allocation14 + $0x20] sm:$0xff]
        %v446 = vld [vmem:[#allocation14 + $0x28] sm:$0xff]
        %v447 = vld [vmem:[#allocation14 + $0x30] sm:$0xff]
        %v448 = vld [vmem:[#allocation14 + $0x38] sm:$0xff]
        %v449 = vld [vmem:[#allocation14 + $0x40] sm:$0xff]
        %v450 = vld [vmem:[#allocation14 + $0x48] sm:$0xff]
        %v451 = vld [vmem:[#allocation14 + $0x50] sm:$0xff]
        %v452 = vld [vmem:[#allocation14 + $0x58] sm:$0xff]
        %v453 = vld [vmem:[#allocation14 + $0x60] sm:$0xff]
        %v454 = vld [vmem:[#allocation14 + $0x68] sm:$0xff]
        %v455 = vld [vmem:[#allocation14 + $0x70] sm:$0xff]
        %v456 = vld [vmem:[#allocation14 + $0x78] sm:$0xff]
        %457 = vmatpush.msra.mxu0 %v456
        %458 = vmatpush.msra.mxu0 %v455
        %459 = vmatpush.msra.mxu0 %v454
        %460 = vmatpush.msra.mxu0 %v453
        %461 = vmatpush.msra.mxu0 %v452
        %462 = vmatpush.msra.mxu0 %v451
        %463 = vmatpush.msra.mxu0 %v450
        %464 = vmatpush.msra.mxu0 %v449
        %465 = vmatpush.msra.mxu0 %v448
        %466 = vmatpush.msra.mxu0 %v447
        %467 = vmatpush.msra.mxu0 %v446
        %468 = vmatpush.msra.mxu0 %v445
        %469 = vmatpush.msra.mxu0 %v444
        %470 = vmatpush.msra.mxu0 %v443
        %471 = vmatpush.msra.mxu0 %v442
        %472 = vmatpush.msra.mxu0 %v441
        %473 = vmatmul.f32.gmra.mxu0 %v404
        %v474 = vpop.f32.mrf.mxu0
        %v475 = vadd.f32 0.0, %v474
        %476 = vdwg.mxu0
        %v477 = vld [vmem:[#allocation2] sm:$0xff]
        %478 = vmatpush.xpose.msra.mxu0 0.0
        %479 = vmatpush.xpose.msra.mxu0 0.0
        %480 = vmatpush.xpose.msra.mxu0 0.0
        %481 = vmatpush.xpose.msra.mxu0 0.0
        %482 = vmatpush.xpose.msra.mxu0 0.0
        %483 = vmatpush.xpose.msra.mxu0 0.0
        %484 = vmatpush.xpose.msra.mxu0 0.0
        %485 = vmatpush.xpose.msra.mxu0 0.0
        %486 = vmatpush.xpose.msra.mxu0 0.0
        %487 = vmatpush.xpose.msra.mxu0 0.0
        %488 = vmatpush.xpose.msra.mxu0 0.0
        %489 = vmatpush.xpose.msra.mxu0 0.0
        %490 = vmatpush.xpose.msra.mxu0 0.0
        %491 = vmatpush.xpose.msra.mxu0 0.0
        %492 = vmatpush.xpose.msra.mxu0 0.0
        %493 = vmatpush.xpose.msra.mxu0 %v439
        %494 = vmatmul.f32.gmra.mxu0 %v477
        %v495 = vpop.f32.mrf.mxu0
        %v496 = vadd.f32 0.0, %v495
        %497 = vdwg.mxu0
        %v498 = vld [vmem:[#allocation3] sm:$0xff]
        %vm499 = vcmask 64512
        %v500 = vsel %vm499, %v496, -inf
        %501 = vmax.xlane.f32.xlu0 %v500
        %v502 = vpop.xlane.xlu0 %501
        %v503 = vmax.f32 %v498, %v502
        %v504 = vsub.f32 %v498, %v503
        %v505 = vmul.f32 %v504, 1.442695
        %v506 = vpow.pop %v505
        %508 = vset.pattern.permute.xlu0 0
        %509 = vperm.xlu0 %508, %v503
        %v510 = vpop.permute.xlu0 %509
        %v512 = vsub.f32 %v496, %v510
        %v513 = vmul.f32 %v512, 1.442695
        %v514 = vpow.pop %v513
        %v515 = vld [vmem:[#allocation4] sm:$0xff]
        %v516 = vmul.f32 %v506, %v515
        %v517 = vsel %vm499, %v514, 0.0
        %518 = vadd.xlane.f32.xlu0 %v517
        %v519 = vpop.xlane.xlu0 %518
        %v520 = vadd.f32 %v516, %v519
        %vm521 = vcmask 7168
        %522 = vst.msk [vmem:[#allocation4] sm:$0xff] %vm521, %v520
        %v523 = vld [vmem:[#allocation5] sm:$0xff]
        %525 = vset.pattern.permute.xlu0 0
        %526 = vperm.xlu0 %525, %v506
        %v527 = vpop.permute.xlu0 %526
        %v529 = vmul.f32 %v527, %v523
        %v531 = vsel %vm499, %v514, 0
        %533 = vmatpush.msra.mxu0 0.0
        %534 = vmatpush.msra.mxu0 0.0
        %535 = vmatpush.msra.mxu0 0.0
        %536 = vmatpush.msra.mxu0 0.0
        %537 = vmatpush.msra.mxu0 0.0
        %538 = vmatpush.msra.mxu0 0.0
        %539 = vmatpush.msra.mxu0 0.0
        %540 = vmatpush.msra.mxu0 0.0
        %541 = vmatpush.msra.mxu0 0.0
        %542 = vmatpush.msra.mxu0 0.0
        %543 = vmatpush.msra.mxu0 0.0
        %544 = vmatpush.msra.mxu0 0.0
        %545 = vmatpush.msra.mxu0 0.0
        %546 = vmatpush.msra.mxu0 0.0
        %547 = vmatpush.msra.mxu0 0.0
        %548 = vmatpush.msra.mxu0 %v475
        %549 = vmatmul.f32.gmra.mxu0 %v531
        %v550 = vpop.f32.mrf.mxu0
        %v551 = vadd.f32 0.0, %v550
        %552 = vdwg.mxu0
        %v553 = vadd.f32 %v529, %v551
        %554 = vst [vmem:[#allocation5] sm:$0xff] %v553
        %555 = vst.msk [vmem:[#allocation3] sm:$0xff] %vm521, %v503
        // Predicated region
        $region65: #{tpu_custom_call.1} parent=39 // pred_check
          %p556 = pneg %p357
        $region66: #{tpu_custom_call.1} parent=39 // pred_check_branch
          %558 = sbr.rel (%p556) target = $region68
        $region67: #{tpu_custom_call.1} parent=39 // pred_region
          %v559 = vld [vmem:[#allocation4] sm:$0xff]
          %v560 = vrcp.pop %v559
          %v561 = vld [vmem:[#allocation5] sm:$0xff]
          %563 = vset.pattern.permute.xlu0 0
          %564 = vperm.xlu0 %563, %v560
          %v565 = vpop.permute.xlu0 %564
          %v567 = vmul.f32 %v561, %v565
          %568 = vst [vmem:[%s356] sm:$0xff] %v567
        $region68: #{tpu_custom_call.1} parent=39 // pred_fallthru
          _
        %s569 = sand.u32 %s174, 1
        %s570 = scalar_lea.sflag [#allocation8], %s569
        %s571 = sand.u32 %s174, 1
        %s572 = smul.addr %s571, 8
        %s573 = scalar_lea.vmem [#allocation15], %s572
        // Predicated region
        $region69: #{tpu_custom_call.1} parent=39 // pred_check
          %p574 = pneg %p184
        $region70: #{tpu_custom_call.1} parent=39 // pred_check_branch
          %576 = sbr.rel (%p574) target = $region72
        $region71: #{tpu_custom_call.1} parent=39 // pred_region
          %578 = vsyncadd %s570, 0
          %s579 = sadd.s32 %s32, %s31
          %s580 = smul.addr %s579, 8
          %s581 = scalar_lea.hbm %s5, %s580
          %s583 = sshll.u32 %s573, 4
          %s584 = int_to_ptr.vmem [resolvable:$true] %s583
          %s585 = sshll.u32 %s581, 4
          %s586 = int_to_ptr.hbm [resolvable:$true] %s585
          %588 = dma.vmem_to_hbm [thread:$0]  %s584, 128, %s586, %s570
        $region72: #{tpu_custom_call.1} parent=39 // pred_fallthru
          _
      $region40: #{tpu_custom_call.1} parent=5 // pred_fallthru
        _
      %p589 = scmp.le.s32.totalorder 2, %s21
      // Predicated region
      $region73: #{tpu_custom_call.1} parent=5 // pred_check
        %p590 = pneg %p589
      $region74: #{tpu_custom_call.1} parent=5 // pred_check_branch
        %592 = sbr.rel (%p590) target = $region76
      $region75: #{tpu_custom_call.1} parent=5 // pred_region
        %s593 = ssub.s32 %s21, 2
        // Predicated region
        $region77: #{tpu_custom_call.1} parent=75 // pred_check
          %p594 = pneg %p190
        $region78: #{tpu_custom_call.1} parent=75 // pred_check_branch
          %596 = sbr.rel (%p594) target = $region80
        $region79: #{tpu_custom_call.1} parent=75 // pred_region
          %s597 = sand.u32 %s175, 1
          %s598 = scalar_lea.sflag [#allocation8], %s597
          %s599 = sand.u32 %s175, 1
          %s600 = smul.addr %s599, 8
          %s601 = scalar_lea.vmem [#allocation15], %s600
          %603 = dma.done %s598, 128
        $region80: #{tpu_custom_call.1} parent=75 // pred_fallthru
          _
      $region76: #{tpu_custom_call.1} parent=5 // pred_fallthru
        _
    $region6: #{tpu_custom_call.1} parent=1 // loop_footer
      %s25 = sadd.s32 1, %s21
    $region7: #{tpu_custom_call.1} parent=1 // loop_footer_branch
      %20 = sbr.rel target = $region3
    $region8: #{tpu_custom_call.1} parent=1 // loop_exit
      _
    %604 = vsyncpa [#allocation7], 1
    %s605 = scalar_lea.sflag [#allocation7], 1
    %606 = vsyncpa %s605, 1
    %607 = vsyncpa [#allocation10], 1
    %s608 = scalar_lea.sflag [#allocation10], 1
    %609 = vsyncpa %s608, 1
    %610 = vsyncpa [#allocation13], 1
    %611 = vsyncpa [#allocation8], 1
    %s612 = scalar_lea.sflag [#allocation8], 1
    %613 = vsyncpa %s612, 1

</llo_original>
